<compile_context>
chip_gen: v7x
topology: tpu7x:2x2x1
jax: 0.10.0
libtpu: 0.0.40
codegen_flags: <defaults>
</compile_context>

<pallas_src>
import functools

import jax
import jax.numpy as jnp
from jax.experimental import pallas as pl
from jax.experimental.pallas import tpu as pltpu


# ----------------------------------------------------------------------------
# Fused Pallas kernel: CoordAtt for a block of `nb` batch elements (rows = nb*C)
# ----------------------------------------------------------------------------
def _coordatt_kernel(x_ref, pool_ref, eh_ref, ew_ref,
                     w1_ref, b1_ref, wh_ref, bh_ref, ww_ref, bw_ref,
                     o_ref, *, H):
    x = x_ref[...].astype(jnp.float32)                        # (rows, H*W) lane-dense

    # pool_h (mean over W), pool_w (mean over H) and the concat along (H+W),
    # fused into a single MXU matmul with a constant pooling matrix.
    y = jnp.dot(x, pool_ref[...], preferred_element_type=jnp.float32)   # (rows, H+W)

    # conv1 (1x1, BN folded, block-diagonal over the batch tile) + h_swish.
    z = jnp.dot(w1_ref[...], y, preferred_element_type=jnp.float32) + b1_ref[...]
    z = z * (jnp.clip(z + 3.0, 0.0, 6.0) * (1.0 / 6.0))       # (nb*mip, H+W)

    zh = z[:, :H]                                             # (nb*mip, H)
    zw = z[:, H:]                                             # (nb*mip, W)

    # conv_h / conv_w (block-diagonal) + sigmoid.  exp + reciprocal ride the EUP
    # slot; no VPU divide.
    vh = jnp.dot(wh_ref[...], zh, preferred_element_type=jnp.float32) + bh_ref[...]
    vw = jnp.dot(ww_ref[...], zw, preferred_element_type=jnp.float32) + bw_ref[...]
    a_h = pl.reciprocal(1.0 + jnp.exp(-vh), approx=False)     # (nb*oup, H)
    a_w = pl.reciprocal(1.0 + jnp.exp(-vw), approx=False)     # (nb*oup, W)

    # Broadcast a_h over W and a_w over H back to (rows, H*W) via constant 0/1
    # expansion matmuls (MXU), keeping lanes dense (oup == C so rows align).
    att = (jnp.dot(a_h, eh_ref[...], preferred_element_type=jnp.float32) *
           jnp.dot(a_w, ew_ref[...], preferred_element_type=jnp.float32))

    o_ref[...] = (x * att).astype(o_ref.dtype)


# ----------------------------------------------------------------------------
# Constant pooling / expansion matrices (built once, outside the kernel)
# ----------------------------------------------------------------------------
def _spatial_matrices(H, W):
    hw = jnp.arange(H * W)
    h_idx = hw // W
    w_idx = hw % W
    ph = (h_idx[:, None] == jnp.arange(H)[None, :]).astype(jnp.float32)   # (HW, H)
    pw = (w_idx[:, None] == jnp.arange(W)[None, :]).astype(jnp.float32)   # (HW, W)
    pool = jnp.concatenate([ph / W, pw / H], axis=1)  # (HW, H+W): [mean over W | mean over H]
    eh = ph.T                                         # (H, HW): broadcast a_h over W
    ew = pw.T                                         # (W, HW): broadcast a_w over H
    return pool, eh, ew


def _block_diag(w, nb):
    """Repeat a (out,in) weight nb times along the diagonal -> (nb*out, nb*in)."""
    return jnp.kron(jnp.eye(nb, dtype=w.dtype), w)


# ----------------------------------------------------------------------------
# Batch-tile chooser: fill sublanes, MiB-scale blocks, VMEM + megacore aware
# ----------------------------------------------------------------------------
def _choose_batch_tile(N, C, HW, itemsize):
    row_bytes = HW * itemsize
    # Pipeline double-buffers the x-in and x-out blocks (~4*block bytes); keep that
    # well under the 64 MiB v7x VMEM.  Also cap rows so the per-step block-diagonal
    # conv weights stay tiny.
    max_rows = max(C, min((40 << 20) // (4 * row_bytes), 512))
    # Target ~2 MiB x blocks (HBM-bandwidth friendly), at least 8 full sublanes.
    target_rows = min(max_rows, max(8, (2 << 20) // row_bytes))
    nb = max(1, min(N, target_rows // max(C, 1)))
    # Prefer >=2 grid iterations (v7x has 2 TensorCores) as long as blocks still
    # fill the 8-sublane tile.
    if nb == N and N > 1 and (N // 2) * C >= 8:
        nb = N // 2

    def ok(n):
        return n >= 1 and N % n == 0 and ((n * C) % 8 == 0 or n == N)

    while nb > 1 and not ok(nb):
        nb -= 1
    if not ok(nb):
        nb = N
    return nb


# ----------------------------------------------------------------------------
# Wrapper: NCHW in, NCHW out (no transposes needed for this module)
# ----------------------------------------------------------------------------
def coord_att_forward(x_nchw, params):
    N, C, H, W = x_nchw.shape
    HW = H * W
    mip = params["w1"].shape[0]
    oup = params["wh"].shape[0]
    assert oup == C, "CoordAtt broadcast multiply requires oup == inp"

    nb = _choose_batch_tile(N, C, HW, x_nchw.dtype.itemsize)
    rows = nb * C
    grid = (N // nb,)

    x2 = x_nchw.reshape(N * C, HW)          # free reshape (row-major collapse)
    pool, eh, ew = _spatial_matrices(H, W)

    # Block-diagonal weights make conv1/conv_h/conv_w batch-flat inside the kernel.
    w1b = _block_diag(params["w1"], nb)                               # (nb*mip, nb*C)
    whb = _block_diag(params["wh"], nb)                               # (nb*oup, nb*mip)
    wwb = _block_diag(params["ww"], nb)                               # (nb*oup, nb*mip)
    # Biases pre-broadcast to the full add shape (no masked (r,1) loads in-kernel).
    b1b = jnp.broadcast_to(jnp.tile(params["b1"], nb)[:, None], (nb * mip, H + W))
    bhb = jnp.broadcast_to(jnp.tile(params["bh"], nb)[:, None], (nb * oup, H))
    bwb = jnp.broadcast_to(jnp.tile(params["bw"], nb)[:, None], (nb * oup, W))

    consts = (pool, eh, ew, w1b, b1b, whb, bhb, wwb, bwb)

    def _const_spec(a):
        return pl.BlockSpec(a.shape, lambda i: (0, 0))

    # VMEM budget: 2x double-buffered (in + out) x blocks + 2x constants + slack.
    block_bytes = rows * HW * x_nchw.dtype.itemsize
    const_bytes = sum(int(a.size) * a.dtype.itemsize for a in consts)
    vmem_limit = int(min(max(4 * block_bytes + 2 * const_bytes + (4 << 20),
                             32 << 20), 48 << 20))

    out2 = pl.pallas_call(
        functools.partial(_coordatt_kernel, H=H),
        out_shape=jax.ShapeDtypeStruct((N * C, HW), x_nchw.dtype),
        grid=grid,
        in_specs=[
            pl.BlockSpec((rows, HW), lambda i: (i, 0)),   # x block (lane-dense, full sublanes)
            _const_spec(pool), _const_spec(eh), _const_spec(ew),
            _const_spec(w1b), _const_spec(b1b),
            _const_spec(whb), _const_spec(bhb),
            _const_spec(wwb), _const_spec(bwb),
        ],
        out_specs=pl.BlockSpec((rows, HW), lambda i: (i, 0)),
        compiler_params=pltpu.CompilerParams(
            dimension_semantics=("parallel",),
            vmem_limit_bytes=vmem_limit,
        ),
    )(x2, *consts)
    return out2.reshape(N, C, H, W)


# ----------------------------------------------------------------------------
# Deterministic parameters (eval-mode BN folded into conv1)
# ----------------------------------------------------------------------------
def make_coordatt_params(key, inp, oup, reduction=32, eps=1e-5):
    mip = max(8, inp // reduction)
    ks = jax.random.split(key, 10)
    w1 = 0.1 * jax.random.normal(ks[0], (mip, inp), jnp.float32)
    b1 = 0.1 * jax.random.normal(ks[1], (mip,), jnp.float32)
    gamma = 1.0 + 0.1 * jax.random.normal(ks[2], (mip,), jnp.float32)
    beta = 0.1 * jax.random.normal(ks[3], (mip,), jnp.float32)
    mean = 0.1 * jax.random.normal(ks[4], (mip,), jnp.float32)
    var = 1.0 + 0.1 * jax.random.uniform(ks[5], (mip,), jnp.float32)
    scale = gamma / jnp.sqrt(var + eps)
    w1f = w1 * scale[:, None]                 # BN scale folded into conv1 weight
    b1f = scale * (b1 - mean) + beta          # BN shift folded into conv1 bias
    wh = 0.1 * jax.random.normal(ks[6], (oup, mip), jnp.float32)
    bh = 0.1 * jax.random.normal(ks[7], (oup,), jnp.float32)
    ww = 0.1 * jax.random.normal(ks[8], (oup, mip), jnp.float32)
    bw = 0.1 * jax.random.normal(ks[9], (oup,), jnp.float32)
    return dict(w1=w1f, b1=b1f, wh=wh, bh=bh, ww=ww, bw=bw)


# ----------------------------------------------------------------------------
# Pure-JAX reference (mirrors the PyTorch forward) for the correctness check
# ----------------------------------------------------------------------------
def coord_att_reference(x, p):
    N, C, H, W = x.shape
    x_h = jnp.mean(x, axis=3)                      # pool over W -> (N, C, H)
    x_w = jnp.mean(x, axis=2)                      # pool over H -> (N, C, W)
    y = jnp.concatenate([x_h, x_w], axis=2)        # (N, C, H+W)
    y = jnp.einsum("mc,ncl->nml", p["w1"], y, precision="highest") + p["b1"][None, :, None]
    y = y * jnp.clip(y + 3.0, 0.0, 6.0) / 6.0      # h_swish
    yh, yw = y[..., :H], y[..., H:]
    a_h = jax.nn.sigmoid(
        jnp.einsum("om,nml->nol", p["wh"], yh, precision="highest") + p["bh"][None, :, None])
    a_w = jax.nn.sigmoid(
        jnp.einsum("om,nml->nol", p["ww"], yw, precision="highest") + p["bw"][None, :, None])
    return x * a_h[:, :, :, None] * a_w[:, :, None, :]


# ----------------------------------------------------------------------------
if __name__ == "__main__":
    # inp = oup = 4, reduction = 32 -> mip = max(8, 4//32) = 8
    N, C, H, W = 2, 4, 16, 16

    key = jax.random.PRNGKey(0)
    kx, kp = jax.random.split(key)
    x = jax.random.normal(kx, (N, C, H, W), jnp.float32)   # NCHW, PyTorch convention
    params = make_coordatt_params(kp, inp=C, oup=C, reduction=32)

    fwd = jax.jit(coord_att_forward)
    out = jax.block_until_ready(fwd(x, params))

    assert out.shape == (N, C, H, W), out.shape
    assert bool(jnp.all(jnp.isfinite(out)))

    ref = coord_att_reference(x, params)
    max_err = float(jnp.max(jnp.abs(out - ref)))
    assert bool(jnp.allclose(out, ref, rtol=5e-4, atol=5e-4)), max_err

    print("KERNEL_OK")
</pallas_src>

<mosaic_0001>
module attributes {stable_mosaic.version = 11 : i64} {
  func.func @_coordatt_kernel(%arg0: i32, %arg1: memref<8x256xf32, #tpu.memory_space<vmem>>, %arg2: memref<256x32xf32, #tpu.memory_space<vmem>>, %arg3: memref<16x256xf32, #tpu.memory_space<vmem>>, %arg4: memref<16x256xf32, #tpu.memory_space<vmem>>, %arg5: memref<16x8xf32, #tpu.memory_space<vmem>>, %arg6: memref<16x32xf32, #tpu.memory_space<vmem>>, %arg7: memref<8x16xf32, #tpu.memory_space<vmem>>, %arg8: memref<8x16xf32, #tpu.memory_space<vmem>>, %arg9: memref<8x16xf32, #tpu.memory_space<vmem>>, %arg10: memref<8x16xf32, #tpu.memory_space<vmem>>, %arg11: memref<8x256xf32, #tpu.memory_space<vmem>>) attributes {dimension_semantics = [#tpu.dimension_semantics<parallel>], iteration_bounds = array<i64: 1>, scalar_prefetch = 0 : i64, scratch_operands = 0 : i64, tpu.core_type = #tpu.core_type<tc>, window_params = [{transform_indices = @transform_0, window_bounds = array<i64: 8, 256>}, {pipeline_mode = #tpu.pipeline_mode<synchronous>, transform_indices = @transform_1, window_bounds = array<i64: 256, 32>}, {pipeline_mode = #tpu.pipeline_mode<synchronous>, transform_indices = @transform_2, window_bounds = array<i64: 16, 256>}, {pipeline_mode = #tpu.pipeline_mode<synchronous>, transform_indices = @transform_3, window_bounds = array<i64: 16, 256>}, {pipeline_mode = #tpu.pipeline_mode<synchronous>, transform_indices = @transform_4, window_bounds = array<i64: 16, 8>}, {pipeline_mode = #tpu.pipeline_mode<synchronous>, transform_indices = @transform_5, window_bounds = array<i64: 16, 32>}, {pipeline_mode = #tpu.pipeline_mode<synchronous>, transform_indices = @transform_6, window_bounds = array<i64: 8, 16>}, {pipeline_mode = #tpu.pipeline_mode<synchronous>, transform_indices = @transform_7, window_bounds = array<i64: 8, 16>}, {pipeline_mode = #tpu.pipeline_mode<synchronous>, transform_indices = @transform_8, window_bounds = array<i64: 8, 16>}, {pipeline_mode = #tpu.pipeline_mode<synchronous>, transform_indices = @transform_9, window_bounds = array<i64: 8, 16>}, {transform_indices = @transform_10, window_bounds = array<i64: 8, 256>}]} {
    %c0 = arith.constant 0 : index
    %c0_0 = arith.constant 0 : index
    %0 = vector.load %arg1[%c0, %c0_0] : memref<8x256xf32, #tpu.memory_space<vmem>>, vector<8x256xf32>
    %c0_1 = arith.constant 0 : index
    %c0_2 = arith.constant 0 : index
    %1 = vector.load %arg2[%c0_1, %c0_2] : memref<256x32xf32, #tpu.memory_space<vmem>>, vector<256x32xf32>
    %cst = arith.constant dense<0.000000e+00> : vector<8x32xf32>
    %2 = tpu.matmul %0, %1, %cst {dimension_numbers = #tpu.dot_dimension_numbers<[1], [0], [0], [1], [0, 0, 1, 1], [], []>} : vector<8x256xf32>, vector<256x32xf32>, vector<8x32xf32> -> vector<8x32xf32>
    %c0_3 = arith.constant 0 : index
    %c0_4 = arith.constant 0 : index
    %3 = vector.load %arg5[%c0_3, %c0_4] : memref<16x8xf32, #tpu.memory_space<vmem>>, vector<16x8xf32>
    %cst_5 = arith.constant dense<0.000000e+00> : vector<16x32xf32>
    %4 = tpu.matmul %3, %2, %cst_5 {dimension_numbers = #tpu.dot_dimension_numbers<[1], [0], [0], [1], [0, 0, 1, 1], [], []>} : vector<16x8xf32>, vector<8x32xf32>, vector<16x32xf32> -> vector<16x32xf32>
    %c0_6 = arith.constant 0 : index
    %c0_7 = arith.constant 0 : index
    %5 = vector.load %arg6[%c0_6, %c0_7] : memref<16x32xf32, #tpu.memory_space<vmem>>, vector<16x32xf32>
    %6 = arith.addf %4, %5 : vector<16x32xf32>
    %cst_8 = arith.constant 3.000000e+00 : f32
    %7 = vector.broadcast %cst_8 : f32 to vector<16x32xf32>
    %8 = arith.addf %6, %7 : vector<16x32xf32>
    %cst_9 = arith.constant 0.000000e+00 : f32
    %cst_10 = arith.constant 6.000000e+00 : f32
    %9 = vector.broadcast %cst_9 : f32 to vector<16x32xf32>
    %10 = arith.maximumf %9, %8 : vector<16x32xf32>
    %11 = vector.broadcast %cst_10 : f32 to vector<16x32xf32>
    %12 = arith.minimumf %11, %10 : vector<16x32xf32>
    %cst_11 = arith.constant 0.166666672 : f32
    %13 = vector.broadcast %cst_11 : f32 to vector<16x32xf32>
    %14 = arith.mulf %12, %13 : vector<16x32xf32>
    %15 = arith.mulf %6, %14 : vector<16x32xf32>
    %16 = vector.extract_strided_slice %15 {offsets = [0, 0], sizes = [16, 16], strides = [1, 1]} : vector<16x32xf32> to vector<16x16xf32>
    %17 = vector.extract_strided_slice %15 {offsets = [0, 16], sizes = [16, 16], strides = [1, 1]} : vector<16x32xf32> to vector<16x16xf32>
    %c0_12 = arith.constant 0 : index
    %c0_13 = arith.constant 0 : index
    %18 = vector.load %arg7[%c0_12, %c0_13] : memref<8x16xf32, #tpu.memory_space<vmem>>, vector<8x16xf32>
    %cst_14 = arith.constant dense<0.000000e+00> : vector<8x16xf32>
    %19 = tpu.matmul %18, %16, %cst_14 {dimension_numbers = #tpu.dot_dimension_numbers<[1], [0], [0], [1], [0, 0, 1, 1], [], []>} : vector<8x16xf32>, vector<16x16xf32>, vector<8x16xf32> -> vector<8x16xf32>
    %c0_15 = arith.constant 0 : index
    %c0_16 = arith.constant 0 : index
    %20 = vector.load %arg8[%c0_15, %c0_16] : memref<8x16xf32, #tpu.memory_space<vmem>>, vector<8x16xf32>
    %21 = arith.addf %19, %20 : vector<8x16xf32>
    %c0_17 = arith.constant 0 : index
    %c0_18 = arith.constant 0 : index
    %22 = vector.load %arg9[%c0_17, %c0_18] : memref<8x16xf32, #tpu.memory_space<vmem>>, vector<8x16xf32>
    %cst_19 = arith.constant dense<0.000000e+00> : vector<8x16xf32>
    %23 = tpu.matmul %22, %17, %cst_19 {dimension_numbers = #tpu.dot_dimension_numbers<[1], [0], [0], [1], [0, 0, 1, 1], [], []>} : vector<8x16xf32>, vector<16x16xf32>, vector<8x16xf32> -> vector<8x16xf32>
    %c0_20 = arith.constant 0 : index
    %c0_21 = arith.constant 0 : index
    %24 = vector.load %arg10[%c0_20, %c0_21] : memref<8x16xf32, #tpu.memory_space<vmem>>, vector<8x16xf32>
    %25 = arith.addf %23, %24 : vector<8x16xf32>
    %cst_22 = arith.constant 0.000000e+00 : f32
    %26 = vector.broadcast %cst_22 : f32 to vector<8x16xf32>
    %27 = arith.subf %26, %21 : vector<8x16xf32>
    %28 = math.exp %27 : vector<8x16xf32>
    %cst_23 = arith.constant 1.000000e+00 : f32
    %29 = vector.broadcast %cst_23 : f32 to vector<8x16xf32>
    %30 = arith.addf %29, %28 : vector<8x16xf32>
    %31 = tpu.reciprocal %30 : vector<8x16xf32> -> vector<8x16xf32>
    %cst_24 = arith.constant 0.000000e+00 : f32
    %32 = vector.broadcast %cst_24 : f32 to vector<8x16xf32>
    %33 = arith.subf %32, %25 : vector<8x16xf32>
    %34 = math.exp %33 : vector<8x16xf32>
    %cst_25 = arith.constant 1.000000e+00 : f32
    %35 = vector.broadcast %cst_25 : f32 to vector<8x16xf32>
    %36 = arith.addf %35, %34 : vector<8x16xf32>
    %37 = tpu.reciprocal %36 : vector<8x16xf32> -> vector<8x16xf32>
    %c0_26 = arith.constant 0 : index
    %c0_27 = arith.constant 0 : index
    %38 = vector.load %arg3[%c0_26, %c0_27] : memref<16x256xf32, #tpu.memory_space<vmem>>, vector<16x256xf32>
    %cst_28 = arith.constant dense<0.000000e+00> : vector<8x256xf32>
    %39 = tpu.matmul %31, %38, %cst_28 {dimension_numbers = #tpu.dot_dimension_numbers<[1], [0], [0], [1], [0, 0, 1, 1], [], []>} : vector<8x16xf32>, vector<16x256xf32>, vector<8x256xf32> -> vector<8x256xf32>
    %c0_29 = arith.constant 0 : index
    %c0_30 = arith.constant 0 : index
    %40 = vector.load %arg4[%c0_29, %c0_30] : memref<16x256xf32, #tpu.memory_space<vmem>>, vector<16x256xf32>
    %cst_31 = arith.constant dense<0.000000e+00> : vector<8x256xf32>
    %41 = tpu.matmul %37, %40, %cst_31 {dimension_numbers = #tpu.dot_dimension_numbers<[1], [0], [0], [1], [0, 0, 1, 1], [], []>} : vector<8x16xf32>, vector<16x256xf32>, vector<8x256xf32> -> vector<8x256xf32>
    %42 = arith.mulf %39, %41 : vector<8x256xf32>
    %43 = arith.mulf %0, %42 : vector<8x256xf32>
    %c0_32 = arith.constant 0 : index
    %c0_33 = arith.constant 0 : index
    %44 = vector.load %arg11[%c0_32, %c0_33] : memref<8x256xf32, #tpu.memory_space<vmem>>, vector<8x256xf32>
    tpu.vector_store %arg11[%c0_32, %c0_33], %43 {strides = array<i32>} : memref<8x256xf32, #tpu.memory_space<vmem>>, vector<8x256xf32>,
    return
  }
  func.func @transform_0(%arg0: i32) -> (i32, i32) {
    %c0_i32 = arith.constant 0 : i32
    %c0_i32_0 = arith.constant 0 : i32
    return %arg0, %c0_i32 : i32, i32
  }
  func.func @transform_1(%arg0: i32) -> (i32, i32) {
    %c0_i32 = arith.constant 0 : i32
    %c0_i32_0 = arith.constant 0 : i32
    %c0_i32_1 = arith.constant 0 : i32
    return %c0_i32, %c0_i32_0 : i32, i32
  }
  func.func @transform_2(%arg0: i32) -> (i32, i32) {
    %c0_i32 = arith.constant 0 : i32
    %c0_i32_0 = arith.constant 0 : i32
    %c0_i32_1 = arith.constant 0 : i32
    return %c0_i32, %c0_i32_0 : i32, i32
  }
  func.func @transform_3(%arg0: i32) -> (i32, i32) {
    %c0_i32 = arith.constant 0 : i32
    %c0_i32_0 = arith.constant 0 : i32
    %c0_i32_1 = arith.constant 0 : i32
    return %c0_i32, %c0_i32_0 : i32, i32
  }
  func.func @transform_4(%arg0: i32) -> (i32, i32) {
    %c0_i32 = arith.constant 0 : i32
    %c0_i32_0 = arith.constant 0 : i32
    %c0_i32_1 = arith.constant 0 : i32
    return %c0_i32, %c0_i32_0 : i32, i32
  }
  func.func @transform_5(%arg0: i32) -> (i32, i32) {
    %c0_i32 = arith.constant 0 : i32
    %c0_i32_0 = arith.constant 0 : i32
    %c0_i32_1 = arith.constant 0 : i32
    return %c0_i32, %c0_i32_0 : i32, i32
  }
  func.func @transform_6(%arg0: i32) -> (i32, i32) {
    %c0_i32 = arith.constant 0 : i32
    %c0_i32_0 = arith.constant 0 : i32
    %c0_i32_1 = arith.constant 0 : i32
    return %c0_i32, %c0_i32_0 : i32, i32
  }
  func.func @transform_7(%arg0: i32) -> (i32, i32) {
    %c0_i32 = arith.constant 0 : i32
    %c0_i32_0 = arith.constant 0 : i32
    %c0_i32_1 = arith.constant 0 : i32
    return %c0_i32, %c0_i32_0 : i32, i32
  }
  func.func @transform_8(%arg0: i32) -> (i32, i32) {
    %c0_i32 = arith.constant 0 : i32
    %c0_i32_0 = arith.constant 0 : i32
    %c0_i32_1 = arith.constant 0 : i32
    return %c0_i32, %c0_i32_0 : i32, i32
  }
  func.func @transform_9(%arg0: i32) -> (i32, i32) {
    %c0_i32 = arith.constant 0 : i32
    %c0_i32_0 = arith.constant 0 : i32
    %c0_i32_1 = arith.constant 0 : i32
    return %c0_i32, %c0_i32_0 : i32, i32
  }
  func.func @transform_10(%arg0: i32) -> (i32, i32) {
    %c0_i32 = arith.constant 0 : i32
    %c0_i32_0 = arith.constant 0 : i32
    return %arg0, %c0_i32 : i32, i32
  }
}

</mosaic_0001>

<llo_original>
// kernel: tile.18
$region0: #{tile.18}
  #allocation0 [shape = 's32[1]{0}', space=sflag, size = 0x4, scoped, tag = 'scoped memory for tile.18']
  %s0 = inlined_call_operand.vmem [shape: f32[8], index: 0, kind: input, shape index: {}]
  %s1 = inlined_call_operand.vmem [shape: f32[2,8], index: 1, kind: output, shape index: {}]
  // Predicated region
  $region2: #{tile.18} parent=0 // pred_check
    _
  $region3: #{tile.18} parent=0 // pred_check_branch
    %3 = sbr.rel (0) target = $region5
  $region4: #{tile.18} parent=0 // pred_region
    _
  $region5: #{tile.18} parent=0 // pred_fallthru
    _
  %v4 = vld [vmem:[%s0] ss:$0 sm:$0xff]
  %5 = vst [vmem:[%s1] sm:$0x3] %v4

// kernel: tile.23
$region0: #{tile.23}
  #allocation0 [shape = 's32[1]{0}', space=sflag, size = 0x4, scoped, tag = 'scoped memory for tile.23']
  %s0 = inlined_call_operand.vmem [shape: f32[4], index: 0, kind: input, shape index: {}]
  %s1 = inlined_call_operand.vmem [shape: f32[2,4], index: 1, kind: output, shape index: {}]
  // Predicated region
  $region2: #{tile.23} parent=0 // pred_check
    _
  $region3: #{tile.23} parent=0 // pred_check_branch
    %3 = sbr.rel (0) target = $region5
  $region4: #{tile.23} parent=0 // pred_region
    _
  $region5: #{tile.23} parent=0 // pred_fallthru
    _
  %v4 = vld [vmem:[%s0] ss:$0 sm:$0xff]
  %5 = vst [vmem:[%s1] sm:$0x3] %v4

// kernel: coord_att_forward.1
$region0: #{coord_att_forward.1}
  #allocation0 [shape = 'u32[]', space=smem, size = 0x4, offset = 0x4, fixed_abs, tag = 'smem constant byte address 0x4 - core index']
  #allocation1 [shape = 'u32[144,128]{1,0:T(1,128)}', space=vmem, size = 0x12000, scoped, tag = 'internal scratch']
  %s0 = inlined_call_operand.vmem [shape: f32[8,256], index: 0, kind: input, shape index: {}]
  %s1 = inlined_call_operand.vmem [shape: f32[256,32], index: 1, kind: input, shape index: {}]
  %s2 = inlined_call_operand.vmem [shape: f32[16,256], index: 2, kind: input, shape index: {}]
  %s3 = inlined_call_operand.vmem [shape: f32[16,256], index: 3, kind: input, shape index: {}]
  %s4 = inlined_call_operand.vmem [shape: f32[16,8], index: 4, kind: input, shape index: {}]
  %s5 = inlined_call_operand.vmem [shape: f32[16,32], index: 5, kind: input, shape index: {}]
  %s6 = inlined_call_operand.vmem [shape: f32[8,16], index: 6, kind: input, shape index: {}]
  %s7 = inlined_call_operand.vmem [shape: f32[8,16], index: 7, kind: input, shape index: {}]
  %s8 = inlined_call_operand.vmem [shape: f32[8,16], index: 8, kind: input, shape index: {}]
  %s9 = inlined_call_operand.vmem [shape: f32[8,16], index: 9, kind: input, shape index: {}]
  %s10 = inlined_call_operand.vmem [shape: f32[8,256], index: 10, kind: output, shape index: {}]
  %s11 = sld [smem:[#allocation0]]
  $region50: #{coord_att_forward.1} parent=0
    _
  %s13 = ssub.s32 1, %s11
  %s14 = scalar_select 0, %s13, %s11
  // Predicated region
  $region2: #{coord_att_forward.1} parent=0 // pred_check
    _
  $region3: #{coord_att_forward.1} parent=0 // pred_check_branch
    %16 = sbr.rel (0) target = $region5
  $region4: #{coord_att_forward.1} parent=0 // pred_region
    _
  $region5: #{coord_att_forward.1} parent=0 // pred_fallthru
    _
  // Predicated region
  $region6: #{coord_att_forward.1} parent=0 // pred_check
    _
  $region7: #{coord_att_forward.1} parent=0 // pred_check_branch
    %18 = sbr.rel (0) target = $region9
  $region8: #{coord_att_forward.1} parent=0 // pred_region
    _
  $region9: #{coord_att_forward.1} parent=0 // pred_fallthru
    _
  // Predicated region
  $region10: #{coord_att_forward.1} parent=0 // pred_check
    _
  $region11: #{coord_att_forward.1} parent=0 // pred_check_branch
    %20 = sbr.rel (0) target = $region13
  $region12: #{coord_att_forward.1} parent=0 // pred_region
    _
  $region13: #{coord_att_forward.1} parent=0 // pred_fallthru
    _
  // Predicated region
  $region14: #{coord_att_forward.1} parent=0 // pred_check
    _
  $region15: #{coord_att_forward.1} parent=0 // pred_check_branch
    %22 = sbr.rel (0) target = $region17
  $region16: #{coord_att_forward.1} parent=0 // pred_region
    _
  $region17: #{coord_att_forward.1} parent=0 // pred_fallthru
    _
  // Predicated region
  $region18: #{coord_att_forward.1} parent=0 // pred_check
    _
  $region19: #{coord_att_forward.1} parent=0 // pred_check_branch
    %24 = sbr.rel (0) target = $region21
  $region20: #{coord_att_forward.1} parent=0 // pred_region
    _
  $region21: #{coord_att_forward.1} parent=0 // pred_fallthru
    _
  // Predicated region
  $region22: #{coord_att_forward.1} parent=0 // pred_check
    _
  $region23: #{coord_att_forward.1} parent=0 // pred_check_branch
    %26 = sbr.rel (0) target = $region25
  $region24: #{coord_att_forward.1} parent=0 // pred_region
    _
  $region25: #{coord_att_forward.1} parent=0 // pred_fallthru
    _
  // Predicated region
  $region26: #{coord_att_forward.1} parent=0 // pred_check
    _
  $region27: #{coord_att_forward.1} parent=0 // pred_check_branch
    %28 = sbr.rel (0) target = $region29
  $region28: #{coord_att_forward.1} parent=0 // pred_region
    _
  $region29: #{coord_att_forward.1} parent=0 // pred_fallthru
    _
  // Predicated region
  $region30: #{coord_att_forward.1} parent=0 // pred_check
    _
  $region31: #{coord_att_forward.1} parent=0 // pred_check_branch
    %30 = sbr.rel (0) target = $region33
  $region32: #{coord_att_forward.1} parent=0 // pred_region
    _
  $region33: #{coord_att_forward.1} parent=0 // pred_fallthru
    _
  // Predicated region
  $region34: #{coord_att_forward.1} parent=0 // pred_check
    _
  $region35: #{coord_att_forward.1} parent=0 // pred_check_branch
    %32 = sbr.rel (0) target = $region37
  $region36: #{coord_att_forward.1} parent=0 // pred_region
    _
  $region37: #{coord_att_forward.1} parent=0 // pred_fallthru
    _
  // Predicated region
  $region38: #{coord_att_forward.1} parent=0 // pred_check
    _
  $region39: #{coord_att_forward.1} parent=0 // pred_check_branch
    %34 = sbr.rel (0) target = $region41
  $region40: #{coord_att_forward.1} parent=0 // pred_region
    _
  $region41: #{coord_att_forward.1} parent=0 // pred_fallthru
    _
  %v35 = vld [vmem:[%s0] sm:$0xff]
  %v36 = vld [vmem:[%s0 + $0x8] sm:$0xff]
  %v37 = vld [vmem:[%s1] sm:$0xff]
  %v38 = vld [vmem:[%s1 + $0x8] sm:$0xff]
  %v39 = vld [vmem:[%s1 + $0x10] sm:$0xff]
  %v40 = vld [vmem:[%s1 + $0x18] sm:$0xff]
  %v41 = vld [vmem:[%s1 + $0x20] sm:$0xff]
  %v42 = vld [vmem:[%s1 + $0x28] sm:$0xff]
  %v43 = vld [vmem:[%s1 + $0x30] sm:$0xff]
  %v44 = vld [vmem:[%s1 + $0x38] sm:$0xff]
  %v45 = vld [vmem:[%s1 + $0x40] sm:$0xff]
  %v46 = vld [vmem:[%s1 + $0x48] sm:$0xff]
  %v47 = vld [vmem:[%s1 + $0x50] sm:$0xff]
  %v48 = vld [vmem:[%s1 + $0x58] sm:$0xff]
  %v49 = vld [vmem:[%s1 + $0x60] sm:$0xff]
  %v50 = vld [vmem:[%s1 + $0x68] sm:$0xff]
  %v51 = vld [vmem:[%s1 + $0x70] sm:$0xff]
  %v52 = vld [vmem:[%s1 + $0x78] sm:$0xff]
  %v53 = vld [vmem:[%s1 + $0x80] sm:$0xff]
  %v54 = vld [vmem:[%s1 + $0x88] sm:$0xff]
  %v55 = vld [vmem:[%s1 + $0x90] sm:$0xff]
  %v56 = vld [vmem:[%s1 + $0x98] sm:$0xff]
  %v57 = vld [vmem:[%s1 + $0xa0] sm:$0xff]
  %v58 = vld [vmem:[%s1 + $0xa8] sm:$0xff]
  %v59 = vld [vmem:[%s1 + $0xb0] sm:$0xff]
  %v60 = vld [vmem:[%s1 + $0xb8] sm:$0xff]
  %v61 = vld [vmem:[%s1 + $0xc0] sm:$0xff]
  %v62 = vld [vmem:[%s1 + $0xc8] sm:$0xff]
  %v63 = vld [vmem:[%s1 + $0xd0] sm:$0xff]
  %v64 = vld [vmem:[%s1 + $0xd8] sm:$0xff]
  %v65 = vld [vmem:[%s1 + $0xe0] sm:$0xff]
  %v66 = vld [vmem:[%s1 + $0xe8] sm:$0xff]
  %v67 = vld [vmem:[%s1 + $0xf0] sm:$0xff]
  %v68 = vld [vmem:[%s1 + $0xf8] sm:$0xff]
  %69 = vmatprep.subr.mxu0 0.0
  %70 = vmatpush1.msra.mxu0 %v37
  %71 = vmatprep.subr.mxu0 0.0
  %72 = vmatpush1.msra.mxu0 %v38
  %73 = vmatprep.subr.mxu0 0.0
  %74 = vmatpush1.msra.mxu0 %v39
  %75 = vmatprep.subr.mxu0 0.0
  %76 = vmatpush1.msra.mxu0 %v40
  %77 = vmatprep.subr.mxu0 0.0
  %78 = vmatpush1.msra.mxu0 %v41
  %79 = vmatprep.subr.mxu0 0.0
  %80 = vmatpush1.msra.mxu0 %v42
  %81 = vmatprep.subr.mxu0 0.0
  %82 = vmatpush1.msra.mxu0 %v43
  %83 = vmatprep.subr.mxu0 0.0
  %84 = vmatpush1.msra.mxu0 %v44
  %85 = vmatprep.subr.mxu0 0.0
  %86 = vmatpush1.msra.mxu0 %v45
  %87 = vmatprep.subr.mxu0 0.0
  %88 = vmatpush1.msra.mxu0 %v46
  %89 = vmatprep.subr.mxu0 0.0
  %90 = vmatpush1.msra.mxu0 %v47
  %91 = vmatprep.subr.mxu0 0.0
  %92 = vmatpush1.msra.mxu0 %v48
  %93 = vmatprep.subr.mxu0 0.0
  %94 = vmatpush1.msra.mxu0 %v49
  %95 = vmatprep.subr.mxu0 0.0
  %96 = vmatpush1.msra.mxu0 %v50
  %97 = vmatprep.subr.mxu0 0.0
  %98 = vmatpush1.msra.mxu0 %v51
  %99 = vmatprep.subr.mxu0 0.0
  %100 = vmatpush1.msra.mxu0 %v52
  %101 = vmatprep.subr.mxu0 0.0
  %102 = vmatpush1.msra.mxu0 %v53
  %103 = vmatprep.subr.mxu0 0.0
  %104 = vmatpush1.msra.mxu0 %v54
  %105 = vmatprep.subr.mxu0 0.0
  %106 = vmatpush1.msra.mxu0 %v55
  %107 = vmatprep.subr.mxu0 0.0
  %108 = vmatpush1.msra.mxu0 %v56
  %109 = vmatprep.subr.mxu0 0.0
  %110 = vmatpush1.msra.mxu0 %v57
  %111 = vmatprep.subr.mxu0 0.0
  %112 = vmatpush1.msra.mxu0 %v58
  %113 = vmatprep.subr.mxu0 0.0
  %114 = vmatpush1.msra.mxu0 %v59
  %115 = vmatprep.subr.mxu0 0.0
  %116 = vmatpush1.msra.mxu0 %v60
  %117 = vmatprep.subr.mxu0 0.0
  %118 = vmatpush1.msra.mxu0 %v61
  %119 = vmatprep.subr.mxu0 0.0
  %120 = vmatpush1.msra.mxu0 %v62
  %121 = vmatprep.subr.mxu0 0.0
  %122 = vmatpush1.msra.mxu0 %v63
  %123 = vmatprep.subr.mxu0 0.0
  %124 = vmatpush1.msra.mxu0 %v64
  %125 = vmatprep.subr.mxu0 0.0
  %126 = vmatpush1.msra.mxu0 %v65
  %127 = vmatprep.subr.mxu0 0.0
  %128 = vmatpush1.msra.mxu0 %v66
  %129 = vmatprep.subr.mxu0 0.0
  %130 = vmatpush1.msra.mxu0 %v67
  %131 = vmatprep.subr.mxu0 0.0
  %132 = vmatpush1.msra.mxu0 %v68
  %133 = vmatprep.mubr.f32.mxu0 %v36
  %134 = vmatmul.mubr.f32.gmra.mrb[0].mxu0 %v35
  %v135 = vpop.f32.mrb[0].mxu0
  %v136 = vadd.f32 0.0, %v135
  %v137 = vpop.f32.mrb[0].mxu0
  %138 = vdwg.mxu0
  %v139 = vld [vmem:[%s4] sm:$0xff]
  %v140 = vld [vmem:[%s4 + $0x8] sm:$0xff]
  %v141 = vld [vmem:[%s5] sm:$0xff]
  %v142 = vld [vmem:[%s5 + $0x8] sm:$0xff]
  %vm143 = vcmask 64512
  %v145 = vsel %vm143, %v139, 0
  %v148 = vsel %vm143, %v140, 0
  %150 = vmatprep.subr.mxu0 0.0
  %151 = vmatpush1.msra.mxu0 %v136
  %152 = vmatprep.subr.mxu0 0.0
  %153 = vmatpush1.msra.mxu0 0.0
  %154 = vmatprep.subr.mxu0 0.0
  %155 = vmatpush1.msra.mxu0 0.0
  %156 = vmatprep.subr.mxu0 0.0
  %157 = vmatpush1.msra.mxu0 0.0
  %158 = vmatprep.subr.mxu0 0.0
  %159 = vmatpush1.msra.mxu0 0.0
  %160 = vmatprep.subr.mxu0 0.0
  %161 = vmatpush1.msra.mxu0 0.0
  %162 = vmatprep.subr.mxu0 0.0
  %163 = vmatpush1.msra.mxu0 0.0
  %164 = vmatprep.subr.mxu0 0.0
  %165 = vmatpush1.msra.mxu0 0.0
  %166 = vmatprep.subr.mxu0 0.0
  %167 = vmatpush1.msra.mxu0 0.0
  %168 = vmatprep.subr.mxu0 0.0
  %169 = vmatpush1.msra.mxu0 0.0
  %170 = vmatprep.subr.mxu0 0.0
  %171 = vmatpush1.msra.mxu0 0.0
  %172 = vmatprep.subr.mxu0 0.0
  %173 = vmatpush1.msra.mxu0 0.0
  %174 = vmatprep.subr.mxu0 0.0
  %175 = vmatpush1.msra.mxu0 0.0
  %176 = vmatprep.subr.mxu0 0.0
  %177 = vmatpush1.msra.mxu0 0.0
  %178 = vmatprep.subr.mxu0 0.0
  %179 = vmatpush1.msra.mxu0 0.0
  %180 = vmatprep.subr.mxu0 0.0
  %181 = vmatpush1.msra.mxu0 0.0
  %182 = vmatprep.subr.mxu0 0.0
  %183 = vmatpush1.msra.mxu0 0.0
  %184 = vmatprep.subr.mxu0 0.0
  %185 = vmatpush1.msra.mxu0 0.0
  %186 = vmatprep.subr.mxu0 0.0
  %187 = vmatpush1.msra.mxu0 0.0
  %188 = vmatprep.subr.mxu0 0.0
  %189 = vmatpush1.msra.mxu0 0.0
  %190 = vmatprep.subr.mxu0 0.0
  %191 = vmatpush1.msra.mxu0 0.0
  %192 = vmatprep.subr.mxu0 0.0
  %193 = vmatpush1.msra.mxu0 0.0
  %194 = vmatprep.subr.mxu0 0.0
  %195 = vmatpush1.msra.mxu0 0.0
  %196 = vmatprep.subr.mxu0 0.0
  %197 = vmatpush1.msra.mxu0 0.0
  %198 = vmatprep.subr.mxu0 0.0
  %199 = vmatpush1.msra.mxu0 0.0
  %200 = vmatprep.subr.mxu0 0.0
  %201 = vmatpush1.msra.mxu0 0.0
  %202 = vmatprep.subr.mxu0 0.0
  %203 = vmatpush1.msra.mxu0 0.0
  %204 = vmatprep.subr.mxu0 0.0
  %205 = vmatpush1.msra.mxu0 0.0
  %206 = vmatprep.subr.mxu0 0.0
  %207 = vmatpush1.msra.mxu0 0.0
  %208 = vmatprep.subr.mxu0 0.0
  %209 = vmatpush1.msra.mxu0 0.0
  %210 = vmatprep.subr.mxu0 0.0
  %211 = vmatpush1.msra.mxu0 0.0
  %212 = vmatprep.subr.mxu0 0.0
  %213 = vmatpush1.msra.mxu0 0.0
  %214 = vmatprep.mubr.f32.mxu0 0.0
  %215 = vmatmul.mubr.f32.gmra.mrb[0].mxu0 %v145
  %v216 = vpop.f32.mrb[0].mxu0
  %v217 = vadd.f32 %v141, %v216
  %v218 = vpop.f32.mrb[0].mxu0
  %219 = vmatprep.mubr.f32.mxu0 0.0
  %220 = vmatmul.mubr.f32.gmra.mrb[0].mxu0 %v148
  %v221 = vpop.f32.mrb[0].mxu0
  %v222 = vadd.f32 %v142, %v221
  %v223 = vpop.f32.mrb[0].mxu0
  %224 = vdwg.mxu0
  %v225 = vadd.f32 %v217, 3.0
  %v226 = vadd.f32 %v222, 3.0
  %v227 = vmax.f32 %v225, 0.0
  %v228 = vmax.f32 %v226, 0.0
  %v229 = vmin.f32 %v227, 6.0
  %v230 = vmin.f32 %v228, 6.0
  %v231 = vmul.f32 %v229, 0.16666667
  %v232 = vmul.f32 %v230, 0.16666667
  %v233 = vmul.f32 %v217, %v231
  %v234 = vmul.f32 %v222, %v232
  %v235 = vld [vmem:[%s6] sm:$0xff]
  %v236 = vld [vmem:[%s7] sm:$0xff]
  %vm237 = vcmask 130048
  %v239 = vsel %vm237, %v235, 0
  %241 = vmatprep.subr.mxu0 0.0
  %242 = vmatpush1.msra.mxu0 %v233
  %243 = vmatprep.subr.mxu0 0.0
  %244 = vmatpush1.msra.mxu0 %v234
  %245 = vmatprep.subr.mxu0 0.0
  %246 = vmatpush1.msra.mxu0 0.0
  %247 = vmatprep.subr.mxu0 0.0
  %248 = vmatpush1.msra.mxu0 0.0
  %249 = vmatprep.subr.mxu0 0.0
  %250 = vmatpush1.msra.mxu0 0.0
  %251 = vmatprep.subr.mxu0 0.0
  %252 = vmatpush1.msra.mxu0 0.0
  %253 = vmatprep.subr.mxu0 0.0
  %254 = vmatpush1.msra.mxu0 0.0
  %255 = vmatprep.subr.mxu0 0.0
  %256 = vmatpush1.msra.mxu0 0.0
  %257 = vmatprep.subr.mxu0 0.0
  %258 = vmatpush1.msra.mxu0 0.0
  %259 = vmatprep.subr.mxu0 0.0
  %260 = vmatpush1.msra.mxu0 0.0
  %261 = vmatprep.subr.mxu0 0.0
  %262 = vmatpush1.msra.mxu0 0.0
  %263 = vmatprep.subr.mxu0 0.0
  %264 = vmatpush1.msra.mxu0 0.0
  %265 = vmatprep.subr.mxu0 0.0
  %266 = vmatpush1.msra.mxu0 0.0
  %267 = vmatprep.subr.mxu0 0.0
  %268 = vmatpush1.msra.mxu0 0.0
  %269 = vmatprep.subr.mxu0 0.0
  %270 = vmatpush1.msra.mxu0 0.0
  %271 = vmatprep.subr.mxu0 0.0
  %272 = vmatpush1.msra.mxu0 0.0
  %273 = vmatprep.subr.mxu0 0.0
  %274 = vmatpush1.msra.mxu0 0.0
  %275 = vmatprep.subr.mxu0 0.0
  %276 = vmatpush1.msra.mxu0 0.0
  %277 = vmatprep.subr.mxu0 0.0
  %278 = vmatpush1.msra.mxu0 0.0
  %279 = vmatprep.subr.mxu0 0.0
  %280 = vmatpush1.msra.mxu0 0.0
  %281 = vmatprep.subr.mxu0 0.0
  %282 = vmatpush1.msra.mxu0 0.0
  %283 = vmatprep.subr.mxu0 0.0
  %284 = vmatpush1.msra.mxu0 0.0
  %285 = vmatprep.subr.mxu0 0.0
  %286 = vmatpush1.msra.mxu0 0.0
  %287 = vmatprep.subr.mxu0 0.0
  %288 = vmatpush1.msra.mxu0 0.0
  %289 = vmatprep.subr.mxu0 0.0
  %290 = vmatpush1.msra.mxu0 0.0
  %291 = vmatprep.subr.mxu0 0.0
  %292 = vmatpush1.msra.mxu0 0.0
  %293 = vmatprep.subr.mxu0 0.0
  %294 = vmatpush1.msra.mxu0 0.0
  %295 = vmatprep.subr.mxu0 0.0
  %296 = vmatpush1.msra.mxu0 0.0
  %297 = vmatprep.subr.mxu0 0.0
  %298 = vmatpush1.msra.mxu0 0.0
  %299 = vmatprep.subr.mxu0 0.0
  %300 = vmatpush1.msra.mxu0 0.0
  %301 = vmatprep.subr.mxu0 0.0
  %302 = vmatpush1.msra.mxu0 0.0
  %303 = vmatprep.subr.mxu0 0.0
  %304 = vmatpush1.msra.mxu0 0.0
  %305 = vmatprep.mubr.f32.mxu0 0.0
  %306 = vmatmul.mubr.f32.gmra.mrb[0].mxu0 %v239
  %v307 = vpop.f32.mrb[0].mxu0
  %v308 = vadd.f32 %v236, %v307
  %v309 = vpop.f32.mrb[0].mxu0
  %310 = vdwg.mxu0
  %v311 = vld [vmem:[%s8] sm:$0xff]
  %v312 = vld [vmem:[%s9] sm:$0xff]
  %315 = vrot.lane.b32.xlu0 %v233, 112
  %v316 = vpop.permute.xlu0 %315
  %317 = vrot.lane.b32.xlu0 %v234, 112
  %v318 = vpop.permute.xlu0 %317
  %v322 = vsel %vm237, %v311, 0
  %324 = vmatprep.subr.mxu0 0.0
  %325 = vmatpush1.msra.mxu0 %v316
  %326 = vmatprep.subr.mxu0 0.0
  %327 = vmatpush1.msra.mxu0 %v318
  %328 = vmatprep.subr.mxu0 0.0
  %329 = vmatpush1.msra.mxu0 0.0
  %330 = vmatprep.subr.mxu0 0.0
  %331 = vmatpush1.msra.mxu0 0.0
  %332 = vmatprep.subr.mxu0 0.0
  %333 = vmatpush1.msra.mxu0 0.0
  %334 = vmatprep.subr.mxu0 0.0
  %335 = vmatpush1.msra.mxu0 0.0
  %336 = vmatprep.subr.mxu0 0.0
  %337 = vmatpush1.msra.mxu0 0.0
  %338 = vmatprep.subr.mxu0 0.0
  %339 = vmatpush1.msra.mxu0 0.0
  %340 = vmatprep.subr.mxu0 0.0
  %341 = vmatpush1.msra.mxu0 0.0
  %342 = vmatprep.subr.mxu0 0.0
  %343 = vmatpush1.msra.mxu0 0.0
  %344 = vmatprep.subr.mxu0 0.0
  %345 = vmatpush1.msra.mxu0 0.0
  %346 = vmatprep.subr.mxu0 0.0
  %347 = vmatpush1.msra.mxu0 0.0
  %348 = vmatprep.subr.mxu0 0.0
  %349 = vmatpush1.msra.mxu0 0.0
  %350 = vmatprep.subr.mxu0 0.0
  %351 = vmatpush1.msra.mxu0 0.0
  %352 = vmatprep.subr.mxu0 0.0
  %353 = vmatpush1.msra.mxu0 0.0
  %354 = vmatprep.subr.mxu0 0.0
  %355 = vmatpush1.msra.mxu0 0.0
  %356 = vmatprep.subr.mxu0 0.0
  %357 = vmatpush1.msra.mxu0 0.0
  %358 = vmatprep.subr.mxu0 0.0
  %359 = vmatpush1.msra.mxu0 0.0
  %360 = vmatprep.subr.mxu0 0.0
  %361 = vmatpush1.msra.mxu0 0.0
  %362 = vmatprep.subr.mxu0 0.0
  %363 = vmatpush1.msra.mxu0 0.0
  %364 = vmatprep.subr.mxu0 0.0
  %365 = vmatpush1.msra.mxu0 0.0
  %366 = vmatprep.subr.mxu0 0.0
  %367 = vmatpush1.msra.mxu0 0.0
  %368 = vmatprep.subr.mxu0 0.0
  %369 = vmatpush1.msra.mxu0 0.0
  %370 = vmatprep.subr.mxu0 0.0
  %371 = vmatpush1.msra.mxu0 0.0
  %372 = vmatprep.subr.mxu0 0.0
  %373 = vmatpush1.msra.mxu0 0.0
  %374 = vmatprep.subr.mxu0 0.0
  %375 = vmatpush1.msra.mxu0 0.0
  %376 = vmatprep.subr.mxu0 0.0
  %377 = vmatpush1.msra.mxu0 0.0
  %378 = vmatprep.subr.mxu0 0.0
  %379 = vmatpush1.msra.mxu0 0.0
  %380 = vmatprep.subr.mxu0 0.0
  %381 = vmatpush1.msra.mxu0 0.0
  %382 = vmatprep.subr.mxu0 0.0
  %383 = vmatpush1.msra.mxu0 0.0
  %384 = vmatprep.subr.mxu0 0.0
  %385 = vmatpush1.msra.mxu0 0.0
  %386 = vmatprep.subr.mxu0 0.0
  %387 = vmatpush1.msra.mxu0 0.0
  %388 = vmatprep.mubr.f32.mxu0 0.0
  %389 = vmatmul.mubr.f32.gmra.mrb[0].mxu0 %v322
  %v390 = vpop.f32.mrb[0].mxu0
  %v391 = vadd.f32 %v312, %v390
  %v392 = vpop.f32.mrb[0].mxu0
  %393 = vdwg.mxu0
  %v394 = vsub.f32 0.0, %v308
  %v395 = vmul.f32 %v394, 1.442695
  %v396 = vpow.pop %v395
  %v397 = vadd.f32 %v396, 1.0
  %v398 = vrcp.pop %v397
  %v399 = vsub.f32 0.0, %v391
  %v400 = vmul.f32 %v399, 1.442695
  %v401 = vpow.pop %v400
  %v402 = vadd.f32 %v401, 1.0
  %v403 = vrcp.pop %v402
  %v404 = vld [vmem:[%s2] sm:$0xff]
  %v405 = vld [vmem:[%s2 + $0x8] sm:$0xff]
  %v406 = vld [vmem:[%s2 + $0x10] sm:$0xff]
  %v407 = vld [vmem:[%s2 + $0x18] sm:$0xff]
  %v409 = vsel %vm237, %v398, 0
  %411 = vmatprep.subr.mxu0 %v405
  %412 = vmatpush1.msra.mxu0 %v404
  %413 = vmatprep.subr.mxu0 %v407
  %414 = vmatpush1.msra.mxu0 %v406
  %415 = vmatprep.subr.mxu0 0.0
  %416 = vmatpush1.msra.mxu0 0.0
  %417 = vmatprep.subr.mxu0 0.0
  %418 = vmatpush1.msra.mxu0 0.0
  %419 = vmatprep.subr.mxu0 0.0
  %420 = vmatpush1.msra.mxu0 0.0
  %421 = vmatprep.subr.mxu0 0.0
  %422 = vmatpush1.msra.mxu0 0.0
  %423 = vmatprep.subr.mxu0 0.0
  %424 = vmatpush1.msra.mxu0 0.0
  %425 = vmatprep.subr.mxu0 0.0
  %426 = vmatpush1.msra.mxu0 0.0
  %427 = vmatprep.subr.mxu0 0.0
  %428 = vmatpush1.msra.mxu0 0.0
  %429 = vmatprep.subr.mxu0 0.0
  %430 = vmatpush1.msra.mxu0 0.0
  %431 = vmatprep.subr.mxu0 0.0
  %432 = vmatpush1.msra.mxu0 0.0
  %433 = vmatprep.subr.mxu0 0.0
  %434 = vmatpush1.msra.mxu0 0.0
  %435 = vmatprep.subr.mxu0 0.0
  %436 = vmatpush1.msra.mxu0 0.0
  %437 = vmatprep.subr.mxu0 0.0
  %438 = vmatpush1.msra.mxu0 0.0
  %439 = vmatprep.subr.mxu0 0.0
  %440 = vmatpush1.msra.mxu0 0.0
  %441 = vmatprep.subr.mxu0 0.0
  %442 = vmatpush1.msra.mxu0 0.0
  %443 = vmatprep.subr.mxu0 0.0
  %444 = vmatpush1.msra.mxu0 0.0
  %445 = vmatprep.subr.mxu0 0.0
  %446 = vmatpush1.msra.mxu0 0.0
  %447 = vmatprep.subr.mxu0 0.0
  %448 = vmatpush1.msra.mxu0 0.0
  %449 = vmatprep.subr.mxu0 0.0
  %450 = vmatpush1.msra.mxu0 0.0
  %451 = vmatprep.subr.mxu0 0.0
  %452 = vmatpush1.msra.mxu0 0.0
  %453 = vmatprep.subr.mxu0 0.0
  %454 = vmatpush1.msra.mxu0 0.0
  %455 = vmatprep.subr.mxu0 0.0
  %456 = vmatpush1.msra.mxu0 0.0
  %457 = vmatprep.subr.mxu0 0.0
  %458 = vmatpush1.msra.mxu0 0.0
  %459 = vmatprep.subr.mxu0 0.0
  %460 = vmatpush1.msra.mxu0 0.0
  %461 = vmatprep.subr.mxu0 0.0
  %462 = vmatpush1.msra.mxu0 0.0
  %463 = vmatprep.subr.mxu0 0.0
  %464 = vmatpush1.msra.mxu0 0.0
  %465 = vmatprep.subr.mxu0 0.0
  %466 = vmatpush1.msra.mxu0 0.0
  %467 = vmatprep.subr.mxu0 0.0
  %468 = vmatpush1.msra.mxu0 0.0
  %469 = vmatprep.subr.mxu0 0.0
  %470 = vmatpush1.msra.mxu0 0.0
  %471 = vmatprep.subr.mxu0 0.0
  %472 = vmatpush1.msra.mxu0 0.0
  %473 = vmatprep.subr.mxu0 0.0
  %474 = vmatpush1.msra.mxu0 0.0
  %475 = vmatprep.mubr.f32.mxu0 0.0
  %476 = vmatmul.mubr.f32.gmra.mrb[0].mxu0 %v409
  %v477 = vpop.f32.mrb[0].mxu0
  %v478 = vadd.f32 0.0, %v477
  %v479 = vpop.f32.mrb[0].mxu0
  %v480 = vadd.f32 0.0, %v479
  %481 = vdwg.mxu0
  %v482 = vld [vmem:[%s3] sm:$0xff]
  %v483 = vld [vmem:[%s3 + $0x8] sm:$0xff]
  %v484 = vld [vmem:[%s3 + $0x10] sm:$0xff]
  %v485 = vld [vmem:[%s3 + $0x18] sm:$0xff]
  %v487 = vsel %vm237, %v403, 0
  %489 = vmatprep.subr.mxu0 %v483
  %490 = vmatpush1.msra.mxu0 %v482
  %491 = vmatprep.subr.mxu0 %v485
  %492 = vmatpush1.msra.mxu0 %v484
  %493 = vmatprep.subr.mxu0 0.0
  %494 = vmatpush1.msra.mxu0 0.0
  %495 = vmatprep.subr.mxu0 0.0
  %496 = vmatpush1.msra.mxu0 0.0
  %497 = vmatprep.subr.mxu0 0.0
  %498 = vmatpush1.msra.mxu0 0.0
  %499 = vmatprep.subr.mxu0 0.0
  %500 = vmatpush1.msra.mxu0 0.0
  %501 = vmatprep.subr.mxu0 0.0
  %502 = vmatpush1.msra.mxu0 0.0
  %503 = vmatprep.subr.mxu0 0.0
  %504 = vmatpush1.msra.mxu0 0.0
  %505 = vmatprep.subr.mxu0 0.0
  %506 = vmatpush1.msra.mxu0 0.0
  %507 = vmatprep.subr.mxu0 0.0
  %508 = vmatpush1.msra.mxu0 0.0
  %509 = vmatprep.subr.mxu0 0.0
  %510 = vmatpush1.msra.mxu0 0.0
  %511 = vmatprep.subr.mxu0 0.0
  %512 = vmatpush1.msra.mxu0 0.0
  %513 = vmatprep.subr.mxu0 0.0
  %514 = vmatpush1.msra.mxu0 0.0
  %515 = vmatprep.subr.mxu0 0.0
  %516 = vmatpush1.msra.mxu0 0.0
  %517 = vmatprep.subr.mxu0 0.0
  %518 = vmatpush1.msra.mxu0 0.0
  %519 = vmatprep.subr.mxu0 0.0
  %520 = vmatpush1.msra.mxu0 0.0
  %521 = vmatprep.subr.mxu0 0.0
  %522 = vmatpush1.msra.mxu0 0.0
  %523 = vmatprep.subr.mxu0 0.0
  %524 = vmatpush1.msra.mxu0 0.0
  %525 = vmatprep.subr.mxu0 0.0
  %526 = vmatpush1.msra.mxu0 0.0
  %527 = vmatprep.subr.mxu0 0.0
  %528 = vmatpush1.msra.mxu0 0.0
  %529 = vmatprep.subr.mxu0 0.0
  %530 = vmatpush1.msra.mxu0 0.0
  %531 = vmatprep.subr.mxu0 0.0
  %532 = vmatpush1.msra.mxu0 0.0
  %533 = vmatprep.subr.mxu0 0.0
  %534 = vmatpush1.msra.mxu0 0.0
  %535 = vmatprep.subr.mxu0 0.0
  %536 = vmatpush1.msra.mxu0 0.0
  %537 = vmatprep.subr.mxu0 0.0
  %538 = vmatpush1.msra.mxu0 0.0
  %539 = vmatprep.subr.mxu0 0.0
  %540 = vmatpush1.msra.mxu0 0.0
  %541 = vmatprep.subr.mxu0 0.0
  %542 = vmatpush1.msra.mxu0 0.0
  %543 = vmatprep.subr.mxu0 0.0
  %544 = vmatpush1.msra.mxu0 0.0
  %545 = vmatprep.subr.mxu0 0.0
  %546 = vmatpush1.msra.mxu0 0.0
  %547 = vmatprep.subr.mxu0 0.0
  %548 = vmatpush1.msra.mxu0 0.0
  %549 = vmatprep.subr.mxu0 0.0
  %550 = vmatpush1.msra.mxu0 0.0
  %551 = vmatprep.subr.mxu0 0.0
  %552 = vmatpush1.msra.mxu0 0.0
  %553 = vmatprep.mubr.f32.mxu0 0.0
  %554 = vmatmul.mubr.f32.gmra.mrb[0].mxu0 %v487
  %v555 = vpop.f32.mrb[0].mxu0
  %v556 = vadd.f32 0.0, %v555
  %v557 = vpop.f32.mrb[0].mxu0
  %v558 = vadd.f32 0.0, %v557
  %559 = vdwg.mxu0
  %v560 = vmul.f32 %v478, %v556
  %v561 = vmul.f32 %v480, %v558
  %v562 = vmul.f32 %v35, %v560
  %v563 = vmul.f32 %v36, %v561
  %564 = vst [vmem:[%s10] sm:$0xff] %v562
  %565 = vst [vmem:[%s10 + $0x8] sm:$0xff] %v563
  // Predicated region
  $region42: #{coord_att_forward.1} parent=0 // pred_check
    _
  $region43: #{coord_att_forward.1} parent=0 // pred_check_branch
    %567 = sbr.rel (0) target = $region45
  $region44: #{coord_att_forward.1} parent=0 // pred_region
    _
  $region45: #{coord_att_forward.1} parent=0 // pred_fallthru
    _
  // Predicated region
  $region46: #{coord_att_forward.1} parent=0 // pred_check
    _
  $region47: #{coord_att_forward.1} parent=0 // pred_check_branch
    %569 = sbr.rel (0) target = $region49
  $region48: #{coord_att_forward.1} parent=0 // pred_region
    _
  $region49: #{coord_att_forward.1} parent=0 // pred_fallthru
    _

</llo_original>
